<compile_context>
chip_gen: v7x
topology: tpu7x:2x2x1
jax: 0.10.0
libtpu: 0.0.40
codegen_flags: <defaults>
</compile_context>

<pallas_src>
import numpy as np

import jax
import jax.numpy as jnp
from jax.experimental import pallas as pl
from jax.experimental.pallas import tpu as pltpu


# ------------------------------ Pallas kernel ------------------------------ #

def _downsample_kernel(x_ref, v_ref, h_ref, o_ref):
    """For each plane t in the block: out[t] = Vmat @ x[t] @ Hmat."""
    vm = v_ref[...]                            # (Ho, H)  constant filter matrix
    hm = h_ref[...]                            # (W, Wo)  constant filter matrix
    tb = x_ref.shape[0]                        # planes per grid step (static)
    for t in range(tb):                        # static unroll, tb is small
        tmp = jnp.dot(vm, x_ref[t], preferred_element_type=jnp.float32)   # (Ho, W)
        o_ref[t] = jnp.dot(tmp, hm,
                           preferred_element_type=jnp.float32).astype(o_ref.dtype)


# ------------------------------ host wrapper ------------------------------- #

def _filter_matrix(n_in, n_out, taps, down, pad0):
    """M[i_in, i_out] = taps[i_in - down*i_out + pad0], 0 outside the support.

    Encodes zero-padding by `pad0`, correlation with `taps` and stride-`down`
    subsampling as one (n_in, n_out) matrix."""
    idx = np.arange(n_in)[:, None] - down * np.arange(n_out)[None, :] + pad0
    valid = (idx >= 0) & (idx < taps.shape[0])
    m = np.where(valid, taps[np.clip(idx, 0, taps.shape[0] - 1)], 0.0)
    return m.astype(np.float32)


def downsample(x_nchw, blur_kernel=(1, 3, 3, 1), factor=2, planes_per_step=8):
    """upfirdn2d(x, make_kernel(blur_kernel), up=1, down=factor, pad=auto)."""
    x = x_nchw.astype(jnp.float32)
    N, C, H, W = x.shape

    taps = np.asarray(blur_kernel, dtype=np.float64)
    if taps.ndim != 1:
        # TODO(synk): non-separable 2-D blur kernels would need the dense
        # (Ho*Wo, H*W) formulation; the module is only used with 1-D kernels.
        raise NotImplementedError("only 1-D (separable) blur kernels supported")
    taps = taps / taps.sum()          # outer(taps, taps) == make_kernel(blur_kernel)
    tflip = taps[::-1].copy()         # upfirdn2d correlates with the flipped kernel
    K = taps.shape[0]
    p = K - factor
    pad0, pad1 = (p + 1) // 2, p // 2
    Ho = (H + pad0 + pad1 - K) // factor + 1
    Wo = (W + pad0 + pad1 - K) // factor + 1

    vmat = jnp.asarray(_filter_matrix(H, Ho, tflip, factor, pad0).T)   # (Ho, H)
    hmat = jnp.asarray(_filter_matrix(W, Wo, tflip, factor, pad0))     # (W, Wo)

    # Group (N*C) planes into blocks of TB per grid step; keep the per-step
    # input block around ~2 MiB so the double-buffered footprint stays small
    # on every TPU generation (v7x has only 64 MiB VMEM).
    nc = N * C
    plane_bytes = H * W * 4
    cap = max(1, min(planes_per_step, (2 << 20) // max(plane_bytes, 1)))
    tb = 1
    for d in range(1, min(nc, cap) + 1):
        if nc % d == 0:
            tb = d
    # TODO(synk): for planes too large for VMEM (H*W*4 >> a few MiB) add row
    # tiling with a halo (manual DMA); whole-plane blocks are fine at SDF sizes.

    x2 = x.reshape(nc, H, W)                   # free reshape, NCHW is contiguous
    out2 = pl.pallas_call(
        _downsample_kernel,
        out_shape=jax.ShapeDtypeStruct((nc, Ho, Wo), jnp.float32),
        grid=(nc // tb,),
        in_specs=[
            pl.BlockSpec((tb, H, W), lambda i: (i, 0, 0)),
            pl.BlockSpec((Ho, H), lambda i: (0, 0)),     # constant -> DMA'd once
            pl.BlockSpec((W, Wo), lambda i: (0, 0)),     # constant -> DMA'd once
        ],
        out_specs=pl.BlockSpec((tb, Ho, Wo), lambda i: (i, 0, 0)),
        compiler_params=pltpu.CompilerParams(
            dimension_semantics=("parallel",)),          # megacore split on v7x
    )(x2, vmat, hmat)

    return out2.reshape(N, C, Ho, Wo)


# --------------------------- pure-JAX reference ----------------------------- #

def _reference_downsample(x, blur_kernel=(1, 3, 3, 1), factor=2):
    """Direct upfirdn2d (pad -> correlate with flipped kernel -> subsample)."""
    taps = np.asarray(blur_kernel, dtype=np.float64)
    k2 = np.outer(taps, taps)
    k2 = (k2 / k2.sum())[::-1, ::-1].astype(np.float32)
    K = taps.shape[0]
    p = K - factor
    pad0, pad1 = (p + 1) // 2, p // 2
    N, C, H, W = x.shape
    Ho = (H + pad0 + pad1 - K) // factor + 1
    Wo = (W + pad0 + pad1 - K) // factor + 1
    xp = jnp.pad(x.astype(jnp.float32),
                 ((0, 0), (0, 0), (pad0, pad1), (pad0, pad1)))
    out = jnp.zeros((N, C, Ho, Wo), jnp.float32)
    for ky in range(K):
        for kx in range(K):
            out = out + k2[ky, kx] * xp[:, :, ky:ky + factor * Ho:factor,
                                        kx:kx + factor * Wo:factor]
    return out


if __name__ == "__main__":
    key = jax.random.PRNGKey(0)
    N, C, H, W = 2, 4, 16, 16
    x = jax.random.normal(key, (N, C, H, W), jnp.float32)

    out = downsample(x, blur_kernel=(1, 3, 3, 1), factor=2, planes_per_step=2)
    out = jax.block_until_ready(out)
    assert out.shape == (N, C, H // 2, W // 2), out.shape

    ref = jax.block_until_ready(_reference_downsample(x))
    assert np.allclose(np.asarray(out), np.asarray(ref), atol=1e-2, rtol=1e-2)

    print("KERNEL_OK")
</pallas_src>

<mosaic_0001>
module attributes {stable_mosaic.version = 11 : i64} {
  func.func @_downsample_kernel(%arg0: i32, %arg1: memref<2x16x16xf32, #tpu.memory_space<vmem>>, %arg2: memref<8x16xf32, #tpu.memory_space<vmem>>, %arg3: memref<16x8xf32, #tpu.memory_space<vmem>>, %arg4: memref<2x8x8xf32, #tpu.memory_space<vmem>>) attributes {dimension_semantics = [#tpu.dimension_semantics<parallel>], iteration_bounds = array<i64: 4>, scalar_prefetch = 0 : i64, scratch_operands = 0 : i64, tpu.core_type = #tpu.core_type<tc>, window_params = [{transform_indices = @transform_0, window_bounds = array<i64: 2, 16, 16>}, {pipeline_mode = #tpu.pipeline_mode<synchronous>, transform_indices = @transform_1, window_bounds = array<i64: 8, 16>}, {pipeline_mode = #tpu.pipeline_mode<synchronous>, transform_indices = @transform_2, window_bounds = array<i64: 16, 8>}, {transform_indices = @transform_3, window_bounds = array<i64: 2, 8, 8>}]} {
    %c0 = arith.constant 0 : index
    %c0_0 = arith.constant 0 : index
    %0 = vector.load %arg2[%c0, %c0_0] : memref<8x16xf32, #tpu.memory_space<vmem>>, vector<8x16xf32>
    %c0_1 = arith.constant 0 : index
    %c0_2 = arith.constant 0 : index
    %1 = vector.load %arg3[%c0_1, %c0_2] : memref<16x8xf32, #tpu.memory_space<vmem>>, vector<16x8xf32>
    %c0_3 = arith.constant 0 : index
    %c0_4 = arith.constant 0 : index
    %c0_5 = arith.constant 0 : index
    %2 = vector.load %arg1[%c0_3, %c0_4, %c0_5] : memref<2x16x16xf32, #tpu.memory_space<vmem>>, vector<1x16x16xf32>
    %3 = vector.shape_cast %2 : vector<1x16x16xf32> to vector<16x16xf32>
    %cst = arith.constant dense<0.000000e+00> : vector<8x16xf32>
    %4 = tpu.matmul %0, %3, %cst {dimension_numbers = #tpu.dot_dimension_numbers<[1], [0], [0], [1], [0, 0, 1, 1], [], []>} : vector<8x16xf32>, vector<16x16xf32>, vector<8x16xf32> -> vector<8x16xf32>
    %cst_6 = arith.constant dense<0.000000e+00> : vector<8x8xf32>
    %5 = tpu.matmul %4, %1, %cst_6 {dimension_numbers = #tpu.dot_dimension_numbers<[1], [0], [0], [1], [0, 0, 1, 1], [], []>} : vector<8x16xf32>, vector<16x8xf32>, vector<8x8xf32> -> vector<8x8xf32>
    %c0_7 = arith.constant 0 : index
    %c0_8 = arith.constant 0 : index
    %c0_9 = arith.constant 0 : index
    %6 = vector.load %arg4[%c0_7, %c0_8, %c0_9] : memref<2x8x8xf32, #tpu.memory_space<vmem>>, vector<1x8x8xf32>
    %7 = vector.shape_cast %6 : vector<1x8x8xf32> to vector<8x8xf32>
    %8 = vector.shape_cast %5 : vector<8x8xf32> to vector<1x8x8xf32>
    tpu.vector_store %arg4[%c0_7, %c0_8, %c0_9], %8 {strides = array<i32>} : memref<2x8x8xf32, #tpu.memory_space<vmem>>, vector<1x8x8xf32>,
    %c1 = arith.constant 1 : index
    %c0_10 = arith.constant 0 : index
    %c0_11 = arith.constant 0 : index
    %9 = vector.load %arg1[%c1, %c0_10, %c0_11] : memref<2x16x16xf32, #tpu.memory_space<vmem>>, vector<1x16x16xf32>
    %10 = vector.shape_cast %9 : vector<1x16x16xf32> to vector<16x16xf32>
    %cst_12 = arith.constant dense<0.000000e+00> : vector<8x16xf32>
    %11 = tpu.matmul %0, %10, %cst_12 {dimension_numbers = #tpu.dot_dimension_numbers<[1], [0], [0], [1], [0, 0, 1, 1], [], []>} : vector<8x16xf32>, vector<16x16xf32>, vector<8x16xf32> -> vector<8x16xf32>
    %cst_13 = arith.constant dense<0.000000e+00> : vector<8x8xf32>
    %12 = tpu.matmul %11, %1, %cst_13 {dimension_numbers = #tpu.dot_dimension_numbers<[1], [0], [0], [1], [0, 0, 1, 1], [], []>} : vector<8x16xf32>, vector<16x8xf32>, vector<8x8xf32> -> vector<8x8xf32>
    %c1_14 = arith.constant 1 : index
    %c0_15 = arith.constant 0 : index
    %c0_16 = arith.constant 0 : index
    %13 = vector.load %arg4[%c1_14, %c0_15, %c0_16] : memref<2x8x8xf32, #tpu.memory_space<vmem>>, vector<1x8x8xf32>
    %14 = vector.shape_cast %13 : vector<1x8x8xf32> to vector<8x8xf32>
    %15 = vector.shape_cast %12 : vector<8x8xf32> to vector<1x8x8xf32>
    tpu.vector_store %arg4[%c1_14, %c0_15, %c0_16], %15 {strides = array<i32>} : memref<2x8x8xf32, #tpu.memory_space<vmem>>, vector<1x8x8xf32>,
    return
  }
  func.func @transform_0(%arg0: i32) -> (i32, i32, i32) {
    %c0_i32 = arith.constant 0 : i32
    %c0_i32_0 = arith.constant 0 : i32
    %c0_i32_1 = arith.constant 0 : i32
    return %arg0, %c0_i32, %c0_i32_0 : i32, i32, i32
  }
  func.func @transform_1(%arg0: i32) -> (i32, i32) {
    %c0_i32 = arith.constant 0 : i32
    %c0_i32_0 = arith.constant 0 : i32
    %c0_i32_1 = arith.constant 0 : i32
    return %c0_i32, %c0_i32_0 : i32, i32
  }
  func.func @transform_2(%arg0: i32) -> (i32, i32) {
    %c0_i32 = arith.constant 0 : i32
    %c0_i32_0 = arith.constant 0 : i32
    %c0_i32_1 = arith.constant 0 : i32
    return %c0_i32, %c0_i32_0 : i32, i32
  }
  func.func @transform_3(%arg0: i32) -> (i32, i32, i32) {
    %c0_i32 = arith.constant 0 : i32
    %c0_i32_0 = arith.constant 0 : i32
    %c0_i32_1 = arith.constant 0 : i32
    return %arg0, %c0_i32, %c0_i32_0 : i32, i32, i32
  }
}

</mosaic_0001>

<llo_original>
// kernel: tpu_custom_call.1
$region0: #{tpu_custom_call.1}
  #allocation0 [shape = 'u32[]', space=smem, size = 0x4, offset = 0x4, fixed_abs, tag = 'smem constant byte address 0x4 - core index']
  #allocation1 [shape = 'u32[144,128]{1,0:T(1,128)}', space=vmem, size = 0x12000, scoped, tag = 'internal scratch']
  %s0 = inlined_call_operand.hbm [shape: f32[8,16,16], index: 0, kind: input, shape index: {}]
  %s1 = inlined_call_operand.vmem [shape: f32[8,16], index: 1, kind: input, shape index: {}]
  %s2 = inlined_call_operand.vmem [shape: f32[16,8], index: 2, kind: input, shape index: {}]
  %s3 = inlined_call_operand.hbm [shape: f32[8,8,8], index: 3, kind: output, shape index: {}]
  %s4 = sld [smem:[#allocation0]]
  $region49: #{tpu_custom_call.1} parent=0
    _
  %s6 = ssub.s32 1, %s4
  %s7 = scalar_select 0, %s6, %s4
  $region1: #{tpu_custom_call.1} parent=0
    #allocation2 [shape = 'u8[32768]{0}', space=vmem, size = 0x8000, scoped, tag = 'input window, operand 0']
    #allocation3 [shape = 's32[2]{0}', space=sflag, size = 0x8, scoped, tag = 'scoped memory for tpu_custom_call.1']
    #allocation4 [shape = 's32[2]{0}', space=sflag, size = 0x8, scoped, tag = 'scoped memory for tpu_custom_call.1']
    #allocation5 [shape = 'u8[16384]{0}', space=vmem, size = 0x4000, scoped, tag = 'output window, operand 0']
    %8 = vsyncpa [#allocation3], 0
    %s9 = scalar_lea.sflag [#allocation3], 1
    %10 = vsyncpa %s9, 0
    %11 = vsyncpa [#allocation4], 0
    %s12 = scalar_lea.sflag [#allocation4], 1
    %13 = vsyncpa %s12, 0
    loop: start=0, step=1, limit=6
    $region2: #{tpu_custom_call.1} parent=1 // loop_pre_header
      _
    $region3: #{tpu_custom_call.1} parent=1 // loop_header
      %s15 = sphi 0, %s19
      %p16 = scmp.ge.s32.totalorder %s15, 6
      %s25 = sphi 0, %s27
      %s28 = sphi 0, %s25
      %s29 = sphi 0, %s28
      %s45 = sphi 0, %s29
      %s49 = sphi 0, %s49
      %s51 = sphi 0, %s49
      %s52 = sphi 0, %s51
      %s66 = sphi 0, %s52
      %s70 = sphi 0, %s70
      %s72 = sphi 0, %s70
      %s73 = sphi 0, %s72
      %s87 = sphi 0, %s73
      %s93 = sphi 0, %s95
      %s96 = sphi 0, %s93
      %s97 = sphi 0, %s96
      %s113 = sphi 0, %s97
    $region4: #{tpu_custom_call.1} parent=1 // loop_header_branch
      %18 = sbr.rel (%p16) target = $region8
    $region5: #{tpu_custom_call.1} parent=1 // loop_body
      %s20 = ssub.s32 %s15, 1
      %s21 = ssub.s32 %s15, 2
      %s22 = sadd.s32 %s15, 1
      %s23 = ssub.s32 %s15, %s22
      %p24 = scmp.eq.s32.totalorder %s23, 0
      %s26 = sadd.s32 %s25, 1
      %s27 = scalar_select %p24, %s25, %s26
      %p30 = pneg %p24
      %p31 = scmp.eq.s32.totalorder %s15, 3
      %p32 = por %p30, %p31
      %p33 = scmp.ne.s32.totalorder %s25, %s28
      %p34 = scmp.eq.s32.totalorder %s15, 0
      %p35 = por %p33, %p34
      %p36 = scmp.ne.s32.totalorder %s25, %s28
      %p37 = scmp.eq.s32.totalorder %s20, 3
      %p38 = por %p36, %p37
      %p39 = scmp.ne.s32.totalorder %s28, %s29
      %p40 = scmp.eq.s32.totalorder %s20, 0
      %p41 = por %p39, %p40
      %p42 = scmp.ne.s32.totalorder %s28, %s29
      %p43 = scmp.eq.s32.totalorder %s21, 3
      %p44 = por %p42, %p43
      %p46 = scmp.ne.s32.totalorder %s29, %s45
      %p47 = scmp.eq.s32.totalorder %s21, 0
      %p48 = por %p46, %p47
      %s50 = sadd.s32 %s49, 1
      %p53 = scmp.eq.s32.totalorder %s15, 3
      %p54 = scmp.ne.s32.totalorder %s49, %s51
      %p55 = scmp.eq.s32.totalorder %s15, 0
      %p56 = por %p54, %p55
      %p57 = scmp.ne.s32.totalorder %s49, %s51
      %p58 = scmp.eq.s32.totalorder %s20, 3
      %p59 = por %p57, %p58
      %p60 = scmp.ne.s32.totalorder %s51, %s52
      %p61 = scmp.eq.s32.totalorder %s20, 0
      %p62 = por %p60, %p61
      %p63 = scmp.ne.s32.totalorder %s51, %s52
      %p64 = scmp.eq.s32.totalorder %s21, 3
      %p65 = por %p63, %p64
      %p67 = scmp.ne.s32.totalorder %s52, %s66
      %p68 = scmp.eq.s32.totalorder %s21, 0
      %p69 = por %p67, %p68
      %s71 = sadd.s32 %s70, 1
      %p74 = scmp.eq.s32.totalorder %s15, 3
      %p75 = scmp.ne.s32.totalorder %s70, %s72
      %p76 = scmp.eq.s32.totalorder %s15, 0
      %p77 = por %p75, %p76
      %p78 = scmp.ne.s32.totalorder %s70, %s72
      %p79 = scmp.eq.s32.totalorder %s20, 3
      %p80 = por %p78, %p79
      %p81 = scmp.ne.s32.totalorder %s72, %s73
      %p82 = scmp.eq.s32.totalorder %s20, 0
      %p83 = por %p81, %p82
      %p84 = scmp.ne.s32.totalorder %s72, %s73
      %p85 = scmp.eq.s32.totalorder %s21, 3
      %p86 = por %p84, %p85
      %p88 = scmp.ne.s32.totalorder %s73, %s87
      %p89 = scmp.eq.s32.totalorder %s21, 0
      %p90 = por %p88, %p89
      %s91 = ssub.s32 %s15, %s22
      %p92 = scmp.eq.s32.totalorder %s91, 0
      %s94 = sadd.s32 %s93, 1
      %s95 = scalar_select %p92, %s93, %s94
      %p98 = pneg %p92
      %p99 = scmp.eq.s32.totalorder %s15, 3
      %p100 = por %p98, %p99
      %p101 = scmp.ne.s32.totalorder %s93, %s96
      %p102 = scmp.eq.s32.totalorder %s15, 0
      %p103 = por %p101, %p102
      %p104 = scmp.ne.s32.totalorder %s93, %s96
      %p105 = scmp.eq.s32.totalorder %s20, 3
      %p106 = por %p104, %p105
      %p107 = scmp.ne.s32.totalorder %s96, %s97
      %p108 = scmp.eq.s32.totalorder %s20, 0
      %p109 = por %p107, %p108
      %p110 = scmp.ne.s32.totalorder %s96, %s97
      %p111 = scmp.eq.s32.totalorder %s21, 3
      %p112 = por %p110, %p111
      %p114 = scmp.ne.s32.totalorder %s97, %s113
      %p115 = scmp.eq.s32.totalorder %s21, 0
      %p116 = por %p114, %p115
      %p117 = scmp.le.s32.totalorder 1, %s15
      %p118 = scmp.lt.s32.totalorder %s15, 5
      %p119 = pnand %p117, %p118
      %p120 = pneg %p119
      // Predicated region
      $region9: #{tpu_custom_call.1} parent=5 // pred_check
        _
      $region10: #{tpu_custom_call.1} parent=5 // pred_check_branch
        %122 = sbr.rel (%p119) target = $region12
      $region11: #{tpu_custom_call.1} parent=5 // pred_region
        %s123 = ssub.s32 %s15, 1
        // Predicated region
        $region13: #{tpu_custom_call.1} parent=11 // pred_check
          %p124 = pneg %p62
        $region14: #{tpu_custom_call.1} parent=11 // pred_check_branch
          %126 = sbr.rel (%p124) target = $region16
        $region15: #{tpu_custom_call.1} parent=11 // pred_region
          _
        $region16: #{tpu_custom_call.1} parent=11 // pred_fallthru
          _
        // Predicated region
        $region17: #{tpu_custom_call.1} parent=11 // pred_check
          %p127 = pneg %p83
        $region18: #{tpu_custom_call.1} parent=11 // pred_check_branch
          %129 = sbr.rel (%p127) target = $region20
        $region19: #{tpu_custom_call.1} parent=11 // pred_region
          _
        $region20: #{tpu_custom_call.1} parent=11 // pred_fallthru
          _
      $region12: #{tpu_custom_call.1} parent=5 // pred_fallthru
        _
      %p130 = scmp.lt.s32.totalorder %s15, 4
      // Predicated region
      $region21: #{tpu_custom_call.1} parent=5 // pred_check
        %p131 = pneg %p130
      $region22: #{tpu_custom_call.1} parent=5 // pred_check_branch
        %133 = sbr.rel (%p131) target = $region24
      $region23: #{tpu_custom_call.1} parent=5 // pred_region
        // Predicated region
        $region25: #{tpu_custom_call.1} parent=23 // pred_check
          %p134 = pneg %p35
        $region26: #{tpu_custom_call.1} parent=23 // pred_check_branch
          %136 = sbr.rel (%p134) target = $region28
        $region27: #{tpu_custom_call.1} parent=23 // pred_region
          %s137 = sand.u32 %s25, 1
          %s138 = scalar_lea.sflag [#allocation3], %s137
          %s139 = sand.u32 %s25, 1
          %s140 = smul.addr %s139, 32
          %s141 = scalar_lea.vmem [#allocation2], %s140
          %s142 = smul.u32 2, %s15
          %s144 = ssub.s32 512, 512
          %145 = vsyncadd %s138, %s144
          %s146 = smul.addr %s142, 2
          %s147 = smul.addr %s146, 128
          %s148 = scalar_lea.hbm %s0, %s147
          %s149 = sshll.u32 %s141, 4
          %s150 = int_to_ptr.vmem [resolvable:$true] %s149
          %155 = dma.hbm_to_vmem [thread:$0]  %s148, 512, %s150, %s138, 128, 128, 8
        $region28: #{tpu_custom_call.1} parent=23 // pred_fallthru
          _
      $region24: #{tpu_custom_call.1} parent=5 // pred_fallthru
        _
      %p156 = scmp.le.s32.totalorder 1, %s15
      %p157 = scmp.lt.s32.totalorder %s15, 5
      %p158 = pnand %p156, %p157
      %p159 = pneg %p158
      // Predicated region
      $region29: #{tpu_custom_call.1} parent=5 // pred_check
        _
      $region30: #{tpu_custom_call.1} parent=5 // pred_check_branch
        %161 = sbr.rel (%p158) target = $region32
      $region31: #{tpu_custom_call.1} parent=5 // pred_region
        %s162 = ssub.s32 %s15, 1
        %s163 = sand.u32 %s28, 1
        %s164 = scalar_lea.sflag [#allocation3], %s163
        %s165 = sand.u32 %s28, 1
        %s166 = smul.addr %s165, 32
        %s167 = scalar_lea.vmem [#allocation2], %s166
        // Predicated region
        $region33: #{tpu_custom_call.1} parent=31 // pred_check
          %p168 = pneg %p41
        $region34: #{tpu_custom_call.1} parent=31 // pred_check_branch
          %170 = sbr.rel (%p168) target = $region36
        $region35: #{tpu_custom_call.1} parent=31 // pred_region
          %171 = dma.done %s164, 512
        $region36: #{tpu_custom_call.1} parent=31 // pred_fallthru
          _
        %s172 = sand.u32 %s28, 1
        %s173 = scalar_lea.sflag [#allocation3], %s172
        %s174 = sand.u32 %s28, 1
        %s175 = smul.addr %s174, 32
        %s176 = scalar_lea.vmem [#allocation2], %s175
        %p177 = pneg %p41
        %p178 = pneg %p38
        %p179 = pneg %p62
        %p180 = pneg %p59
        %p181 = pneg %p83
        %p182 = pneg %p80
        %p183 = pneg %p109
        %p184 = pneg %p106
        %s185 = sand.u32 %s96, 1
        %s186 = scalar_lea.sflag [#allocation4], %s185
        %s187 = sand.u32 %s96, 1
        %s188 = smul.addr %s187, 16
        %s189 = scalar_lea.vmem [#allocation5], %s188
        %s190 = smul.u32 2, %s20
        %s191 = smul.u32 2, %s20
        %v192 = vld [vmem:[%s1] sm:$0xff]
        %v193 = vld [vmem:[%s2] sm:$0xff]
        %v194 = vld [vmem:[%s2 + $0x8] sm:$0xff]
        %v195 = vld [vmem:[%s167] sm:$0xff]
        %v196 = vld [vmem:[%s167 + $0x8] sm:$0xff]
        %vm197 = vcmask 130048
        %v199 = vsel %vm197, %v192, 0
        %201 = vmatprep.subr.mxu0 0.0
        %202 = vmatpush1.msra.mxu0 %v195
        %203 = vmatprep.subr.mxu0 0.0
        %204 = vmatpush1.msra.mxu0 %v196
        %205 = vmatprep.subr.mxu0 0.0
        %206 = vmatpush1.msra.mxu0 0.0
        %207 = vmatprep.subr.mxu0 0.0
        %208 = vmatpush1.msra.mxu0 0.0
        %209 = vmatprep.subr.mxu0 0.0
        %210 = vmatpush1.msra.mxu0 0.0
        %211 = vmatprep.subr.mxu0 0.0
        %212 = vmatpush1.msra.mxu0 0.0
        %213 = vmatprep.subr.mxu0 0.0
        %214 = vmatpush1.msra.mxu0 0.0
        %215 = vmatprep.subr.mxu0 0.0
        %216 = vmatpush1.msra.mxu0 0.0
        %217 = vmatprep.subr.mxu0 0.0
        %218 = vmatpush1.msra.mxu0 0.0
        %219 = vmatprep.subr.mxu0 0.0
        %220 = vmatpush1.msra.mxu0 0.0
        %221 = vmatprep.subr.mxu0 0.0
        %222 = vmatpush1.msra.mxu0 0.0
        %223 = vmatprep.subr.mxu0 0.0
        %224 = vmatpush1.msra.mxu0 0.0
        %225 = vmatprep.subr.mxu0 0.0
        %226 = vmatpush1.msra.mxu0 0.0
        %227 = vmatprep.subr.mxu0 0.0
        %228 = vmatpush1.msra.mxu0 0.0
        %229 = vmatprep.subr.mxu0 0.0
        %230 = vmatpush1.msra.mxu0 0.0
        %231 = vmatprep.subr.mxu0 0.0
        %232 = vmatpush1.msra.mxu0 0.0
        %233 = vmatprep.subr.mxu0 0.0
        %234 = vmatpush1.msra.mxu0 0.0
        %235 = vmatprep.subr.mxu0 0.0
        %236 = vmatpush1.msra.mxu0 0.0
        %237 = vmatprep.subr.mxu0 0.0
        %238 = vmatpush1.msra.mxu0 0.0
        %239 = vmatprep.subr.mxu0 0.0
        %240 = vmatpush1.msra.mxu0 0.0
        %241 = vmatprep.subr.mxu0 0.0
        %242 = vmatpush1.msra.mxu0 0.0
        %243 = vmatprep.subr.mxu0 0.0
        %244 = vmatpush1.msra.mxu0 0.0
        %245 = vmatprep.subr.mxu0 0.0
        %246 = vmatpush1.msra.mxu0 0.0
        %247 = vmatprep.subr.mxu0 0.0
        %248 = vmatpush1.msra.mxu0 0.0
        %249 = vmatprep.subr.mxu0 0.0
        %250 = vmatpush1.msra.mxu0 0.0
        %251 = vmatprep.subr.mxu0 0.0
        %252 = vmatpush1.msra.mxu0 0.0
        %253 = vmatprep.subr.mxu0 0.0
        %254 = vmatpush1.msra.mxu0 0.0
        %255 = vmatprep.subr.mxu0 0.0
        %256 = vmatpush1.msra.mxu0 0.0
        %257 = vmatprep.subr.mxu0 0.0
        %258 = vmatpush1.msra.mxu0 0.0
        %259 = vmatprep.subr.mxu0 0.0
        %260 = vmatpush1.msra.mxu0 0.0
        %261 = vmatprep.subr.mxu0 0.0
        %262 = vmatpush1.msra.mxu0 0.0
        %263 = vmatprep.subr.mxu0 0.0
        %264 = vmatpush1.msra.mxu0 0.0
        %265 = vmatprep.mubr.f32.mxu0 0.0
        %266 = vmatmul.mubr.f32.gmra.mrb[0].mxu0 %v199
        %v267 = vpop.f32.mrb[0].mxu0
        %v268 = vadd.f32 0.0, %v267
        %v269 = vpop.f32.mrb[0].mxu0
        %270 = vdwg.mxu0
        %v272 = vsel %vm197, %v268, 0
        %274 = vmatprep.subr.mxu0 0.0
        %275 = vmatpush1.msra.mxu0 %v193
        %276 = vmatprep.subr.mxu0 0.0
        %277 = vmatpush1.msra.mxu0 %v194
        %278 = vmatprep.subr.mxu0 0.0
        %279 = vmatpush1.msra.mxu0 0.0
        %280 = vmatprep.subr.mxu0 0.0
        %281 = vmatpush1.msra.mxu0 0.0
        %282 = vmatprep.subr.mxu0 0.0
        %283 = vmatpush1.msra.mxu0 0.0
        %284 = vmatprep.subr.mxu0 0.0
        %285 = vmatpush1.msra.mxu0 0.0
        %286 = vmatprep.subr.mxu0 0.0
        %287 = vmatpush1.msra.mxu0 0.0
        %288 = vmatprep.subr.mxu0 0.0
        %289 = vmatpush1.msra.mxu0 0.0
        %290 = vmatprep.subr.mxu0 0.0
        %291 = vmatpush1.msra.mxu0 0.0
        %292 = vmatprep.subr.mxu0 0.0
        %293 = vmatpush1.msra.mxu0 0.0
        %294 = vmatprep.subr.mxu0 0.0
        %295 = vmatpush1.msra.mxu0 0.0
        %296 = vmatprep.subr.mxu0 0.0
        %297 = vmatpush1.msra.mxu0 0.0
        %298 = vmatprep.subr.mxu0 0.0
        %299 = vmatpush1.msra.mxu0 0.0
        %300 = vmatprep.subr.mxu0 0.0
        %301 = vmatpush1.msra.mxu0 0.0
        %302 = vmatprep.subr.mxu0 0.0
        %303 = vmatpush1.msra.mxu0 0.0
        %304 = vmatprep.subr.mxu0 0.0
        %305 = vmatpush1.msra.mxu0 0.0
        %306 = vmatprep.subr.mxu0 0.0
        %307 = vmatpush1.msra.mxu0 0.0
        %308 = vmatprep.subr.mxu0 0.0
        %309 = vmatpush1.msra.mxu0 0.0
        %310 = vmatprep.subr.mxu0 0.0
        %311 = vmatpush1.msra.mxu0 0.0
        %312 = vmatprep.subr.mxu0 0.0
        %313 = vmatpush1.msra.mxu0 0.0
        %314 = vmatprep.subr.mxu0 0.0
        %315 = vmatpush1.msra.mxu0 0.0
        %316 = vmatprep.subr.mxu0 0.0
        %317 = vmatpush1.msra.mxu0 0.0
        %318 = vmatprep.subr.mxu0 0.0
        %319 = vmatpush1.msra.mxu0 0.0
        %320 = vmatprep.subr.mxu0 0.0
        %321 = vmatpush1.msra.mxu0 0.0
        %322 = vmatprep.subr.mxu0 0.0
        %323 = vmatpush1.msra.mxu0 0.0
        %324 = vmatprep.subr.mxu0 0.0
        %325 = vmatpush1.msra.mxu0 0.0
        %326 = vmatprep.subr.mxu0 0.0
        %327 = vmatpush1.msra.mxu0 0.0
        %328 = vmatprep.subr.mxu0 0.0
        %329 = vmatpush1.msra.mxu0 0.0
        %330 = vmatprep.subr.mxu0 0.0
        %331 = vmatpush1.msra.mxu0 0.0
        %332 = vmatprep.subr.mxu0 0.0
        %333 = vmatpush1.msra.mxu0 0.0
        %334 = vmatprep.subr.mxu0 0.0
        %335 = vmatpush1.msra.mxu0 0.0
        %336 = vmatprep.subr.mxu0 0.0
        %337 = vmatpush1.msra.mxu0 0.0
        %338 = vmatprep.mubr.f32.mxu0 0.0
        %339 = vmatmul.mubr.f32.gmra.mrb[0].mxu0 %v272
        %v340 = vpop.f32.mrb[0].mxu0
        %v341 = vadd.f32 0.0, %v340
        %v342 = vpop.f32.mrb[0].mxu0
        %343 = vdwg.mxu0
        %vm344 = vcmask 64512
        %345 = vst.msk [vmem:[%s189] sm:$0xff] %vm344, %v341
        %s346 = scalar_lea.vmem %s167, 16 [#allocation2]
        %v347 = vld [vmem:[%s346] sm:$0xff]
        %v348 = vld [vmem:[%s346 + $0x8] sm:$0xff]
        %349 = vmatprep.subr.mxu0 0.0
        %350 = vmatpush1.msra.mxu0 %v347
        %351 = vmatprep.subr.mxu0 0.0
        %352 = vmatpush1.msra.mxu0 %v348
        %353 = vmatprep.subr.mxu0 0.0
        %354 = vmatpush1.msra.mxu0 0.0
        %355 = vmatprep.subr.mxu0 0.0
        %356 = vmatpush1.msra.mxu0 0.0
        %357 = vmatprep.subr.mxu0 0.0
        %358 = vmatpush1.msra.mxu0 0.0
        %359 = vmatprep.subr.mxu0 0.0
        %360 = vmatpush1.msra.mxu0 0.0
        %361 = vmatprep.subr.mxu0 0.0
        %362 = vmatpush1.msra.mxu0 0.0
        %363 = vmatprep.subr.mxu0 0.0
        %364 = vmatpush1.msra.mxu0 0.0
        %365 = vmatprep.subr.mxu0 0.0
        %366 = vmatpush1.msra.mxu0 0.0
        %367 = vmatprep.subr.mxu0 0.0
        %368 = vmatpush1.msra.mxu0 0.0
        %369 = vmatprep.subr.mxu0 0.0
        %370 = vmatpush1.msra.mxu0 0.0
        %371 = vmatprep.subr.mxu0 0.0
        %372 = vmatpush1.msra.mxu0 0.0
        %373 = vmatprep.subr.mxu0 0.0
        %374 = vmatpush1.msra.mxu0 0.0
        %375 = vmatprep.subr.mxu0 0.0
        %376 = vmatpush1.msra.mxu0 0.0
        %377 = vmatprep.subr.mxu0 0.0
        %378 = vmatpush1.msra.mxu0 0.0
        %379 = vmatprep.subr.mxu0 0.0
        %380 = vmatpush1.msra.mxu0 0.0
        %381 = vmatprep.subr.mxu0 0.0
        %382 = vmatpush1.msra.mxu0 0.0
        %383 = vmatprep.subr.mxu0 0.0
        %384 = vmatpush1.msra.mxu0 0.0
        %385 = vmatprep.subr.mxu0 0.0
        %386 = vmatpush1.msra.mxu0 0.0
        %387 = vmatprep.subr.mxu0 0.0
        %388 = vmatpush1.msra.mxu0 0.0
        %389 = vmatprep.subr.mxu0 0.0
        %390 = vmatpush1.msra.mxu0 0.0
        %391 = vmatprep.subr.mxu0 0.0
        %392 = vmatpush1.msra.mxu0 0.0
        %393 = vmatprep.subr.mxu0 0.0
        %394 = vmatpush1.msra.mxu0 0.0
        %395 = vmatprep.subr.mxu0 0.0
        %396 = vmatpush1.msra.mxu0 0.0
        %397 = vmatprep.subr.mxu0 0.0
        %398 = vmatpush1.msra.mxu0 0.0
        %399 = vmatprep.subr.mxu0 0.0
        %400 = vmatpush1.msra.mxu0 0.0
        %401 = vmatprep.subr.mxu0 0.0
        %402 = vmatpush1.msra.mxu0 0.0
        %403 = vmatprep.subr.mxu0 0.0
        %404 = vmatpush1.msra.mxu0 0.0
        %405 = vmatprep.subr.mxu0 0.0
        %406 = vmatpush1.msra.mxu0 0.0
        %407 = vmatprep.subr.mxu0 0.0
        %408 = vmatpush1.msra.mxu0 0.0
        %409 = vmatprep.subr.mxu0 0.0
        %410 = vmatpush1.msra.mxu0 0.0
        %411 = vmatprep.subr.mxu0 0.0
        %412 = vmatpush1.msra.mxu0 0.0
        %413 = vmatprep.mubr.f32.mxu0 0.0
        %414 = vmatmul.mubr.f32.gmra.mrb[0].mxu0 %v199
        %v415 = vpop.f32.mrb[0].mxu0
        %v416 = vadd.f32 0.0, %v415
        %v417 = vpop.f32.mrb[0].mxu0
        %418 = vdwg.mxu0
        %v420 = vsel %vm197, %v416, 0
        %422 = vmatprep.subr.mxu0 0.0
        %423 = vmatpush1.msra.mxu0 %v193
        %424 = vmatprep.subr.mxu0 0.0
        %425 = vmatpush1.msra.mxu0 %v194
        %426 = vmatprep.subr.mxu0 0.0
        %427 = vmatpush1.msra.mxu0 0.0
        %428 = vmatprep.subr.mxu0 0.0
        %429 = vmatpush1.msra.mxu0 0.0
        %430 = vmatprep.subr.mxu0 0.0
        %431 = vmatpush1.msra.mxu0 0.0
        %432 = vmatprep.subr.mxu0 0.0
        %433 = vmatpush1.msra.mxu0 0.0
        %434 = vmatprep.subr.mxu0 0.0
        %435 = vmatpush1.msra.mxu0 0.0
        %436 = vmatprep.subr.mxu0 0.0
        %437 = vmatpush1.msra.mxu0 0.0
        %438 = vmatprep.subr.mxu0 0.0
        %439 = vmatpush1.msra.mxu0 0.0
        %440 = vmatprep.subr.mxu0 0.0
        %441 = vmatpush1.msra.mxu0 0.0
        %442 = vmatprep.subr.mxu0 0.0
        %443 = vmatpush1.msra.mxu0 0.0
        %444 = vmatprep.subr.mxu0 0.0
        %445 = vmatpush1.msra.mxu0 0.0
        %446 = vmatprep.subr.mxu0 0.0
        %447 = vmatpush1.msra.mxu0 0.0
        %448 = vmatprep.subr.mxu0 0.0
        %449 = vmatpush1.msra.mxu0 0.0
        %450 = vmatprep.subr.mxu0 0.0
        %451 = vmatpush1.msra.mxu0 0.0
        %452 = vmatprep.subr.mxu0 0.0
        %453 = vmatpush1.msra.mxu0 0.0
        %454 = vmatprep.subr.mxu0 0.0
        %455 = vmatpush1.msra.mxu0 0.0
        %456 = vmatprep.subr.mxu0 0.0
        %457 = vmatpush1.msra.mxu0 0.0
        %458 = vmatprep.subr.mxu0 0.0
        %459 = vmatpush1.msra.mxu0 0.0
        %460 = vmatprep.subr.mxu0 0.0
        %461 = vmatpush1.msra.mxu0 0.0
        %462 = vmatprep.subr.mxu0 0.0
        %463 = vmatpush1.msra.mxu0 0.0
        %464 = vmatprep.subr.mxu0 0.0
        %465 = vmatpush1.msra.mxu0 0.0
        %466 = vmatprep.subr.mxu0 0.0
        %467 = vmatpush1.msra.mxu0 0.0
        %468 = vmatprep.subr.mxu0 0.0
        %469 = vmatpush1.msra.mxu0 0.0
        %470 = vmatprep.subr.mxu0 0.0
        %471 = vmatpush1.msra.mxu0 0.0
        %472 = vmatprep.subr.mxu0 0.0
        %473 = vmatpush1.msra.mxu0 0.0
        %474 = vmatprep.subr.mxu0 0.0
        %475 = vmatpush1.msra.mxu0 0.0
        %476 = vmatprep.subr.mxu0 0.0
        %477 = vmatpush1.msra.mxu0 0.0
        %478 = vmatprep.subr.mxu0 0.0
        %479 = vmatpush1.msra.mxu0 0.0
        %480 = vmatprep.subr.mxu0 0.0
        %481 = vmatpush1.msra.mxu0 0.0
        %482 = vmatprep.subr.mxu0 0.0
        %483 = vmatpush1.msra.mxu0 0.0
        %484 = vmatprep.subr.mxu0 0.0
        %485 = vmatpush1.msra.mxu0 0.0
        %486 = vmatprep.mubr.f32.mxu0 0.0
        %487 = vmatmul.mubr.f32.gmra.mrb[0].mxu0 %v420
        %v488 = vpop.f32.mrb[0].mxu0
        %v489 = vadd.f32 0.0, %v488
        %v490 = vpop.f32.mrb[0].mxu0
        %491 = vdwg.mxu0
        %s492 = scalar_lea.vmem %s189, 8 [#allocation5]
        %493 = vst.msk [vmem:[%s492] sm:$0xff] %vm344, %v489
        %s494 = sand.u32 %s96, 1
        %s495 = scalar_lea.sflag [#allocation4], %s494
        %s496 = sand.u32 %s96, 1
        %s497 = smul.addr %s496, 16
        %s498 = scalar_lea.vmem [#allocation5], %s497
        // Predicated region
        $region37: #{tpu_custom_call.1} parent=31 // pred_check
          %p499 = pneg %p106
        $region38: #{tpu_custom_call.1} parent=31 // pred_check_branch
          %501 = sbr.rel (%p499) target = $region40
        $region39: #{tpu_custom_call.1} parent=31 // pred_region
          %s502 = smul.u32 2, %s20
          %s504 = ssub.s32 256, 256
          %505 = vsyncadd %s495, %s504
          %s506 = smul.addr %s502, 128
          %s507 = scalar_lea.hbm %s3, %s506
          %s508 = sshll.u32 %s498, 4
          %s509 = int_to_ptr.vmem [resolvable:$true] %s508
          %514 = dma.vmem_to_hbm [thread:$0]  %s509, 256, %s507, %s495, 128, 128, 8
        $region40: #{tpu_custom_call.1} parent=31 // pred_fallthru
          _
      $region32: #{tpu_custom_call.1} parent=5 // pred_fallthru
        _
      %p515 = scmp.le.s32.totalorder 2, %s15
      // Predicated region
      $region41: #{tpu_custom_call.1} parent=5 // pred_check
        %p516 = pneg %p515
      $region42: #{tpu_custom_call.1} parent=5 // pred_check_branch
        %518 = sbr.rel (%p516) target = $region44
      $region43: #{tpu_custom_call.1} parent=5 // pred_region
        %s519 = ssub.s32 %s15, 2
        // Predicated region
        $region45: #{tpu_custom_call.1} parent=43 // pred_check
          %p520 = pneg %p112
        $region46: #{tpu_custom_call.1} parent=43 // pred_check_branch
          %522 = sbr.rel (%p520) target = $region48
        $region47: #{tpu_custom_call.1} parent=43 // pred_region
          %s523 = sand.u32 %s97, 1
          %s524 = scalar_lea.sflag [#allocation4], %s523
          %s525 = sand.u32 %s97, 1
          %s526 = smul.addr %s525, 16
          %s527 = scalar_lea.vmem [#allocation5], %s526
          %528 = dma.done %s524, 256
        $region48: #{tpu_custom_call.1} parent=43 // pred_fallthru
          _
      $region44: #{tpu_custom_call.1} parent=5 // pred_fallthru
        _
    $region6: #{tpu_custom_call.1} parent=1 // loop_footer
      %s19 = sadd.s32 1, %s15
    $region7: #{tpu_custom_call.1} parent=1 // loop_footer_branch
      %14 = sbr.rel target = $region3
    $region8: #{tpu_custom_call.1} parent=1 // loop_exit
      _
    %529 = vsyncpa [#allocation3], 1
    %s530 = scalar_lea.sflag [#allocation3], 1
    %531 = vsyncpa %s530, 1
    %532 = vsyncpa [#allocation4], 1
    %s533 = scalar_lea.sflag [#allocation4], 1
    %534 = vsyncpa %s533, 1

</llo_original>
